<compile_context>
chip_gen: v5e
topology: v5e:2x2
jax: 0.10.0
libtpu: 0.0.40
codegen_flags: <defaults>
</compile_context>

<pallas_src>
import jax
import jax.numpy as jnp
from jax import lax
from jax.experimental import pallas as pl
from jax.experimental.pallas import tpu as pltpu

BN_EPS = 1e-5
CIN_PAD = 8  # pad the 3 input channels to one full f32 sublane group

VSPEC = pl.BlockSpec(memory_space=pltpu.MemorySpace.VMEM)


# ---------------------------------------------------------------------------
# Kernel 1: fused 3x3 conv (normalize folded in) + bias + ReLU + AvgPool
# ---------------------------------------------------------------------------
def _make_conv_pool_kernel(tile_h, w, h, cin_pad, cout):
    m = tile_h * w
    inv_hw = 1.0 / float(h * w)

    def kernel(x_ref, w_ref, b_ref, feat_ref, pool_ref):
        # x_ref:    (1, 1, tile_h+2, W+2, CIN_PAD) halo-row window (compute dt)
        # w_ref:    (9*CIN_PAD, Cout)              normalize-folded weights
        # b_ref:    (1, Cout)                      normalize-folded bias (f32)
        # feat_ref: (1, tile_h*W, Cout)            ReLU'd features (compute dt)
        # pool_ref: (1, 1, Cout)                   running sum -> mean (f32)
        hj = pl.program_id(1)

        @pl.when(hj == 0)
        def _init():
            pool_ref[...] = jnp.zeros_like(pool_ref)

        # Register-level im2col: 9 shifted (m, CIN_PAD) slabs concatenated
        # along lanes -> (m, 72), then a SINGLE MXU dot with f32 accumulation
        # (replaces 9 K=8 dots + 8 full accumulator passes through VMEM).
        slabs = []
        for t in range(9):
            kh, kw = divmod(t, 3)
            slab = x_ref[0, 0, pl.ds(kh, tile_h), pl.ds(kw, w), :]
            slabs.append(slab.reshape(m, cin_pad))
        lhs = jnp.concatenate(slabs, axis=-1)                  # (m, 9*CIN_PAD)
        acc = jnp.dot(lhs, w_ref[...], preferred_element_type=jnp.float32)

        acc = jnp.maximum(acc + b_ref[...], 0.0)       # bias + ReLU in f32

        # Lane-dense store (Cout multiple of 128); compute-dtype (bf16 on the
        # perf path) halves the dominant HBM writeback.
        feat_ref[...] = acc[None].astype(feat_ref.dtype)

        # Fused AdaptiveAvgPool2d(1): resident f32 accumulator over row tiles.
        pool_ref[...] += jnp.sum(acc, axis=0, keepdims=True)[None]

        @pl.when(hj == pl.num_programs(1) - 1)
        def _finalize():
            pool_ref[...] = pool_ref[...] * inv_hw

    return kernel


def conv3x3_relu_pool(xph, w_flat, b_fold, *, h, w, tile_h, feat_dtype):
    """xph: (N, n_tiles, tile_h+2, W+2, CIN_PAD) halo-row windows,
    w_flat: (9*CIN_PAD, Cout), b_fold: (1, Cout)."""
    n, n_tiles, th2, wp, cpad = xph.shape
    cout = w_flat.shape[-1]
    m_tile = tile_h * w
    assert h % tile_h == 0
    assert (m_tile % 8 == 0) or (m_tile == h * w)
    assert n_tiles == h // tile_h and th2 == tile_h + 2

    kernel = _make_conv_pool_kernel(tile_h, w, h, cpad, cout)

    return pl.pallas_call(
        kernel,
        out_shape=(
            jax.ShapeDtypeStruct((n, h * w, cout), feat_dtype),
            jax.ShapeDtypeStruct((n, 1, cout), jnp.float32),
        ),
        grid_spec=pltpu.PrefetchScalarGridSpec(
            num_scalar_prefetch=0,
            grid=(n, n_tiles),
            in_specs=[
                # small (tile_h+2)-row halo window per grid step (not the
                # whole padded image) -> VMEM stays small even at 224x224.
                pl.BlockSpec((1, 1, th2, wp, cpad),
                             lambda i, j: (i, j, 0, 0, 0)),
                pl.BlockSpec((9 * cpad, cout), lambda i, j: (0, 0)),
                pl.BlockSpec((1, cout), lambda i, j: (0, 0)),
            ],
            out_specs=[
                pl.BlockSpec((1, m_tile, cout), lambda i, j: (i, j, 0)),
                pl.BlockSpec((1, 1, cout), lambda i, j: (i, 0, 0)),
            ],
        ),
        compiler_params=pltpu.CompilerParams(
            dimension_semantics=("parallel", "arbitrary"),
            # headroom inside v7x's 64 MiB physical VMEM; blocks here are
            # far smaller after the halo-window fix.
            vmem_limit_bytes=48 * 1024 * 1024,
        ),
    )(xph, w_flat, b_fold)


# ---------------------------------------------------------------------------
# Kernel 2: classifier head on the pooled (N, C) vector
#   Linear (BN1d folded in) + ReLU + Dropout(identity) + Linear
# ---------------------------------------------------------------------------
def _head_kernel(p_ref, w1_ref, b1_ref, w2_ref, b2_ref, o_ref):
    hdn = jnp.dot(p_ref[...], w1_ref[...], preferred_element_type=jnp.float32)
    hdn = jnp.maximum(hdn + b1_ref[...], 0.0)
    # TODO(synk): Dropout(0.3) is identity at inference.
    out = jnp.dot(hdn, w2_ref[...], preferred_element_type=jnp.float32)
    o_ref[...] = (out + b2_ref[...]).astype(o_ref.dtype)


def classifier_head(pooled, w1f, b1f, w2, b2):
    n = pooled.shape[0]
    classes = w2.shape[1]
    return pl.pallas_call(
        _head_kernel,
        out_shape=jax.ShapeDtypeStruct((n, classes), jnp.float32),
        in_specs=[VSPEC] * 5,
        out_specs=VSPEC,
    )(pooled, w1f, b1f.reshape(1, -1), w2, b2.reshape(1, -1))


# ---------------------------------------------------------------------------
# Parameters + full forward
# ---------------------------------------------------------------------------
def init_params(key, in_chans=3, num_features=128, num_classes=16):
    ks = jax.random.split(key, 10)
    hidden = num_features // 2
    return {
        'mean': jnp.array([0.485, 0.456, 0.406], jnp.float32),
        'std': jnp.array([0.229, 0.224, 0.225], jnp.float32),
        'w_conv': 0.1 * jax.random.normal(ks[0], (3, 3, in_chans, num_features),
                                          jnp.float32),
        'b_conv': 0.1 * jax.random.normal(ks[1], (num_features,), jnp.float32),
        'w1': 0.1 * jax.random.normal(ks[2], (num_features, hidden),
                                      jnp.float32),
        'b1': 0.1 * jax.random.normal(ks[3], (hidden,), jnp.float32),
        'bn_gamma': 1.0 + 0.1 * jax.random.normal(ks[4], (hidden,),
                                                  jnp.float32),
        'bn_beta': 0.1 * jax.random.normal(ks[5], (hidden,), jnp.float32),
        'bn_mean': 0.1 * jax.random.normal(ks[6], (hidden,), jnp.float32),
        'bn_var': 0.5 + jnp.abs(jax.random.normal(ks[7], (hidden,),
                                                  jnp.float32)),
        'w2': 0.1 * jax.random.normal(ks[8], (hidden, num_classes),
                                      jnp.float32),
        'b2': 0.1 * jax.random.normal(ks[9], (num_classes,), jnp.float32),
    }


def _auto_tile_h(h, w, cout, feat_bytes, budget_bytes=8 << 20):
    """Largest VMEM-friendly row tile: h % tile_h == 0, m_tile 8-aligned
    (prefer 256-/128-aligned M for the MXU), double-buffered feature tile
    within `budget_bytes`. Constraint matches conv3x3_relu_pool's assert."""
    def ok(t):
        m = t * w
        if h % t:
            return False
        if (m % 8 != 0) and (m != h * w):
            return False
        return 2 * m * cout * feat_bytes <= budget_bytes

    cands = [t for t in range(1, h + 1) if ok(t)]
    if not cands:
        return h

    def score(t):
        m = t * w
        return (m % 256 == 0, m % 128 == 0, m)

    return max(cands, key=score)


def viscarus_forward(x_nchw, params, *, tile_h=None,
                     compute_dtype=jnp.bfloat16, hooks_nchw=False):
    """x_nchw: (N, C, H, W) float32, like the PyTorch module."""
    n, c, h, w = x_nchw.shape
    mean, std = params['mean'], params['std']
    w_hwio = params['w_conv']
    cout = w_hwio.shape[-1]
    feat_dtype = compute_dtype
    if tile_h is None:
        tile_h = _auto_tile_h(h, w, cout, jnp.dtype(feat_dtype).itemsize)

    # ---- fold Normalize(mean, std) into the conv --------------------------
    #   conv(pad0(normalize(x))) == conv'(pad_mean(x)) with
    #   w' = w/std (per input channel) and b' = b - sum_taps w * mean/std,
    #   because the mean-valued padding ring normalizes to exactly zero.
    inv_std = 1.0 / std
    w_fold = w_hwio * inv_std[None, None, :, None]
    b_fold = params['b_conv'] - jnp.einsum('hwio,i->o', w_hwio, mean * inv_std)
    w_pad = jnp.zeros((3, 3, CIN_PAD, cout), jnp.float32)
    w_pad = w_pad.at[:, :, :c, :].set(w_fold)
    w_flat = w_pad.reshape(9 * CIN_PAD, cout).astype(compute_dtype)

    # ---- mean-padded, channel-padded NHWC input, cast ONCE ----------------
    x_nhwc = jnp.transpose(x_nchw, (0, 2, 3, 1))
    ring = jnp.zeros((CIN_PAD,), jnp.float32).at[:c].set(mean)
    xp = jnp.broadcast_to(ring, (n, h + 2, w + 2, CIN_PAD))
    xp = xp.at[:, 1:h + 1, 1:w + 1, :c].set(x_nhwc).astype(compute_dtype)

    # ---- overlapping (tile_h+2)-row halo windows (wrapper side) -----------
    n_tiles = h // tile_h
    row_idx = (jnp.arange(n_tiles)[:, None] * tile_h
               + jnp.arange(tile_h + 2)[None, :])
    xph = xp[:, row_idx]                 # (n, n_tiles, tile_h+2, w+2, CIN_PAD)

    feat_flat, pooled = conv3x3_relu_pool(
        xph, w_flat, b_fold.reshape(1, cout), h=h, w=w, tile_h=tile_h,
        feat_dtype=feat_dtype)

    # ---- classifier head (BatchNorm1d eval folded into the first Linear) --
    s = params['bn_gamma'] / jnp.sqrt(params['bn_var'] + BN_EPS)
    t = params['bn_beta'] - params['bn_mean'] * s
    w1f = params['w1'] * s[None, :]
    b1f = params['b1'] * s + t
    predictions = classifier_head(pooled.reshape(n, cout), w1f, b1f,
                                  params['w2'], params['b2'])

    # Hooks emitted NHWC (no extra full-HBM pass).
    # TODO(synk): PyTorch forward hooks record NCHW; set hooks_nchw=True to
    # reproduce that layout at the cost of a second full HBM pass.
    features = feat_flat.reshape(n, h, w, cout)
    if hooks_nchw:
        features = jnp.transpose(features, (0, 3, 1, 2))
    return {
        'predictions': predictions,
        'attention_maps': {'block_0_attention': features},
        'feature_maps': {'block_0_features': features},
    }


# ---------------------------------------------------------------------------
# Pure-JAX reference (for correctness check)
# ---------------------------------------------------------------------------
def reference_forward(x_nchw, p):
    x = jnp.transpose(x_nchw, (0, 2, 3, 1))
    x = (x - p['mean']) / p['std']
    feat = lax.conv_general_dilated(
        x, p['w_conv'], window_strides=(1, 1), padding='SAME',
        dimension_numbers=('NHWC', 'HWIO', 'NHWC')) + p['b_conv']
    feat = jnp.maximum(feat, 0.0)
    pooled = jnp.mean(feat, axis=(1, 2))
    hdn = pooled @ p['w1'] + p['b1']
    hdn = (hdn - p['bn_mean']) / jnp.sqrt(p['bn_var'] + BN_EPS) \
        * p['bn_gamma'] + p['bn_beta']
    hdn = jnp.maximum(hdn, 0.0)
    logits = hdn @ p['w2'] + p['b2']
    return logits, feat  # feat is NHWC


if __name__ == "__main__":
    key = jax.random.PRNGKey(0)
    k_x, k_p = jax.random.split(key)

    # batch=2, in_chans=3 (Normalize implies 3 channels), 16x16 images,
    # num_features=128 (multiple of 128 -> lane-dense feature stores; the real
    # EfficientNet-B0 uses 1280), hidden=64, num_classes=16.
    x = jax.random.uniform(k_x, (2, 3, 16, 16), jnp.float32)
    params = init_params(k_p, in_chans=3, num_features=128, num_classes=16)

    ref_logits, ref_feat_nhwc = reference_forward(x, params)
    ref_logits = jax.block_until_ready(ref_logits)

    # f32 path with tile_h=8 -> two row tiles per image, exercising the halo
    # windows and the fused-pool accumulation across grid steps. Tolerance
    # covers MXU f32 precision-mode differences vs XLA's conv.
    out32 = viscarus_forward(x, params, tile_h=8, compute_dtype=jnp.float32)
    p32 = jax.block_until_ready(out32['predictions'])
    assert p32.shape == (2, 16)
    err = jnp.max(jnp.abs(p32 - ref_logits))
    assert jnp.allclose(p32, ref_logits, atol=1e-2, rtol=1e-2), \
        f"f32 predictions max abs err = {err}"
    feat32 = out32['feature_maps']['block_0_features']   # NHWC
    assert feat32.shape == (2, 16, 16, 128)
    ferr = jnp.max(jnp.abs(feat32 - ref_feat_nhwc))
    assert jnp.allclose(feat32, ref_feat_nhwc, atol=1e-2, rtol=1e-2), \
        f"f32 feature-map max abs err = {ferr}"

    # Perf path: bf16 MXU operands + bf16 feature store, f32 accumulation /
    # elementwise math; auto tile_h (256-aligned m_tile).
    outbf = viscarus_forward(x, params, compute_dtype=jnp.bfloat16)
    pbf = jax.block_until_ready(outbf['predictions'])
    errbf = jnp.max(jnp.abs(pbf - ref_logits))
    assert jnp.allclose(pbf, ref_logits, atol=1e-1, rtol=1e-1), \
        f"bf16 predictions max abs err = {errbf}"
    assert outbf['feature_maps']['block_0_features'].dtype == jnp.bfloat16

    print("KERNEL_OK")
</pallas_src>

<mosaic_0001>
module attributes {stable_mosaic.version = 11 : i64} {
  func.func @kernel(%arg0: i32, %arg1: i32, %arg2: memref<1x1x10x18x8xf32, #tpu.memory_space<vmem>>, %arg3: memref<72x128xf32, #tpu.memory_space<vmem>>, %arg4: memref<1x128xf32, #tpu.memory_space<vmem>>, %arg5: memref<1x128x128xf32, #tpu.memory_space<vmem>>, %arg6: memref<1x1x128xf32, #tpu.memory_space<vmem>>) attributes {dimension_semantics = [#tpu.dimension_semantics<parallel>, #tpu.dimension_semantics<arbitrary>], iteration_bounds = array<i64: 2, 2>, scalar_prefetch = 0 : i64, scratch_operands = 0 : i64, tpu.core_type = #tpu.core_type<tc>, window_params = [{transform_indices = @transform_0, window_bounds = array<i64: 1, 1, 10, 18, 8>}, {pipeline_mode = #tpu.pipeline_mode<synchronous>, transform_indices = @transform_1, window_bounds = array<i64: 72, 128>}, {pipeline_mode = #tpu.pipeline_mode<synchronous>, transform_indices = @transform_2, window_bounds = array<i64: 1, 128>}, {transform_indices = @transform_3, window_bounds = array<i64: 1, 128, 128>}, {transform_indices = @transform_4, window_bounds = array<i64: 1, 1, 128>}]} {
    %c0_i32 = arith.constant 0 : i32
    %0 = arith.cmpi eq, %arg1, %c0_i32 : i32
    %1 = arith.extui %0 : i1 to i32
    %c0_i32_0 = arith.constant 0 : i32
    %2 = arith.cmpi ne, %1, %c0_i32_0 : i32
    scf.if %2 {
      %cst_59 = arith.constant 0.000000e+00 : f32
      %49 = vector.broadcast %cst_59 : f32 to vector<1x1x128xf32>
      %c0_60 = arith.constant 0 : index
      %c0_61 = arith.constant 0 : index
      %c0_62 = arith.constant 0 : index
      %50 = vector.load %arg6[%c0_60, %c0_61, %c0_62] : memref<1x1x128xf32, #tpu.memory_space<vmem>>, vector<1x1x128xf32>
      tpu.vector_store %arg6[%c0_60, %c0_61, %c0_62], %49 {strides = array<i32>} : memref<1x1x128xf32, #tpu.memory_space<vmem>>, vector<1x1x128xf32>,
    } else {
    }
    %c0 = arith.constant 0 : index
    %c0_1 = arith.constant 0 : index
    %c0_2 = arith.constant 0 : index
    %c0_3 = arith.constant 0 : index
    %c0_4 = arith.constant 0 : index
    %3 = vector.load %arg2[%c0, %c0_1, %c0_2, %c0_3, %c0_4] : memref<1x1x10x18x8xf32, #tpu.memory_space<vmem>>, vector<1x1x8x16x8xf32>
    %4 = vector.shape_cast %3 : vector<1x1x8x16x8xf32> to vector<8x16x8xf32>
    %5 = vector.shape_cast %4 : vector<8x16x8xf32> to vector<128x8xf32>
    %c0_5 = arith.constant 0 : index
    %c0_6 = arith.constant 0 : index
    %c0_7 = arith.constant 0 : index
    %c1 = arith.constant 1 : index
    %c0_8 = arith.constant 0 : index
    %6 = vector.load %arg2[%c0_5, %c0_6, %c0_7, %c1, %c0_8] : memref<1x1x10x18x8xf32, #tpu.memory_space<vmem>>, vector<1x1x8x16x8xf32>
    %7 = vector.shape_cast %6 : vector<1x1x8x16x8xf32> to vector<8x16x8xf32>
    %8 = vector.shape_cast %7 : vector<8x16x8xf32> to vector<128x8xf32>
    %c0_9 = arith.constant 0 : index
    %c0_10 = arith.constant 0 : index
    %c0_11 = arith.constant 0 : index
    %c2 = arith.constant 2 : index
    %c0_12 = arith.constant 0 : index
    %9 = vector.load %arg2[%c0_9, %c0_10, %c0_11, %c2, %c0_12] : memref<1x1x10x18x8xf32, #tpu.memory_space<vmem>>, vector<1x1x8x16x8xf32>
    %10 = vector.shape_cast %9 : vector<1x1x8x16x8xf32> to vector<8x16x8xf32>
    %11 = vector.shape_cast %10 : vector<8x16x8xf32> to vector<128x8xf32>
    %c0_13 = arith.constant 0 : index
    %c0_14 = arith.constant 0 : index
    %c1_15 = arith.constant 1 : index
    %c0_16 = arith.constant 0 : index
    %c0_17 = arith.constant 0 : index
    %12 = vector.load %arg2[%c0_13, %c0_14, %c1_15, %c0_16, %c0_17] : memref<1x1x10x18x8xf32, #tpu.memory_space<vmem>>, vector<1x1x8x16x8xf32>
    %13 = vector.shape_cast %12 : vector<1x1x8x16x8xf32> to vector<8x16x8xf32>
    %14 = vector.shape_cast %13 : vector<8x16x8xf32> to vector<128x8xf32>
    %c0_18 = arith.constant 0 : index
    %c0_19 = arith.constant 0 : index
    %c1_20 = arith.constant 1 : index
    %c1_21 = arith.constant 1 : index
    %c0_22 = arith.constant 0 : index
    %15 = vector.load %arg2[%c0_18, %c0_19, %c1_20, %c1_21, %c0_22] : memref<1x1x10x18x8xf32, #tpu.memory_space<vmem>>, vector<1x1x8x16x8xf32>
    %16 = vector.shape_cast %15 : vector<1x1x8x16x8xf32> to vector<8x16x8xf32>
    %17 = vector.shape_cast %16 : vector<8x16x8xf32> to vector<128x8xf32>
    %c0_23 = arith.constant 0 : index
    %c0_24 = arith.constant 0 : index
    %c1_25 = arith.constant 1 : index
    %c2_26 = arith.constant 2 : index
    %c0_27 = arith.constant 0 : index
    %18 = vector.load %arg2[%c0_23, %c0_24, %c1_25, %c2_26, %c0_27] : memref<1x1x10x18x8xf32, #tpu.memory_space<vmem>>, vector<1x1x8x16x8xf32>
    %19 = vector.shape_cast %18 : vector<1x1x8x16x8xf32> to vector<8x16x8xf32>
    %20 = vector.shape_cast %19 : vector<8x16x8xf32> to vector<128x8xf32>
    %c0_28 = arith.constant 0 : index
    %c0_29 = arith.constant 0 : index
    %c2_30 = arith.constant 2 : index
    %c0_31 = arith.constant 0 : index
    %c0_32 = arith.constant 0 : index
    %21 = vector.load %arg2[%c0_28, %c0_29, %c2_30, %c0_31, %c0_32] : memref<1x1x10x18x8xf32, #tpu.memory_space<vmem>>, vector<1x1x8x16x8xf32>
    %22 = vector.shape_cast %21 : vector<1x1x8x16x8xf32> to vector<8x16x8xf32>
    %23 = vector.shape_cast %22 : vector<8x16x8xf32> to vector<128x8xf32>
    %c0_33 = arith.constant 0 : index
    %c0_34 = arith.constant 0 : index
    %c2_35 = arith.constant 2 : index
    %c1_36 = arith.constant 1 : index
    %c0_37 = arith.constant 0 : index
    %24 = vector.load %arg2[%c0_33, %c0_34, %c2_35, %c1_36, %c0_37] : memref<1x1x10x18x8xf32, #tpu.memory_space<vmem>>, vector<1x1x8x16x8xf32>
    %25 = vector.shape_cast %24 : vector<1x1x8x16x8xf32> to vector<8x16x8xf32>
    %26 = vector.shape_cast %25 : vector<8x16x8xf32> to vector<128x8xf32>
    %c0_38 = arith.constant 0 : index
    %c0_39 = arith.constant 0 : index
    %c2_40 = arith.constant 2 : index
    %c2_41 = arith.constant 2 : index
    %c0_42 = arith.constant 0 : index
    %27 = vector.load %arg2[%c0_38, %c0_39, %c2_40, %c2_41, %c0_42] : memref<1x1x10x18x8xf32, #tpu.memory_space<vmem>>, vector<1x1x8x16x8xf32>
    %28 = vector.shape_cast %27 : vector<1x1x8x16x8xf32> to vector<8x16x8xf32>
    %29 = vector.shape_cast %28 : vector<8x16x8xf32> to vector<128x8xf32>
    %30 = tpu.concatenate %5, %8, %11, %14, %17, %20, %23, %26, %29 in 1 : vector<128x8xf32>, vector<128x8xf32>, vector<128x8xf32>, vector<128x8xf32>, vector<128x8xf32>, vector<128x8xf32>, vector<128x8xf32>, vector<128x8xf32>, vector<128x8xf32> -> vector<128x72xf32>
    %c0_43 = arith.constant 0 : index
    %c0_44 = arith.constant 0 : index
    %31 = vector.load %arg3[%c0_43, %c0_44] : memref<72x128xf32, #tpu.memory_space<vmem>>, vector<72x128xf32>
    %cst = arith.constant dense<0.000000e+00> : vector<128x128xf32>
    %32 = tpu.matmul %30, %31, %cst {dimension_numbers = #tpu.dot_dimension_numbers<[1], [0], [0], [1], [0, 0, 1, 1], [], []>} : vector<128x72xf32>, vector<72x128xf32>, vector<128x128xf32> -> vector<128x128xf32>
    %c0_45 = arith.constant 0 : index
    %c0_46 = arith.constant 0 : index
    %33 = vector.load %arg4[%c0_45, %c0_46] : memref<1x128xf32, #tpu.memory_space<vmem>>, vector<1x128xf32>
    %34 = vector.broadcast %33 : vector<1x128xf32> to vector<128x128xf32>
    %35 = arith.addf %32, %34 : vector<128x128xf32>
    %cst_47 = arith.constant 0.000000e+00 : f32
    %36 = vector.broadcast %cst_47 : f32 to vector<128x128xf32>
    %37 = arith.maximumf %35, %36 : vector<128x128xf32>
    %38 = vector.shape_cast %37 : vector<128x128xf32> to vector<1x128x128xf32>
    %c0_48 = arith.constant 0 : index
    %c0_49 = arith.constant 0 : index
    %c0_50 = arith.constant 0 : index
    %39 = vector.load %arg5[%c0_48, %c0_49, %c0_50] : memref<1x128x128xf32, #tpu.memory_space<vmem>>, vector<1x128x128xf32>
    tpu.vector_store %arg5[%c0_48, %c0_49, %c0_50], %38 {strides = array<i32>} : memref<1x128x128xf32, #tpu.memory_space<vmem>>, vector<1x128x128xf32>,
    %c0_51 = arith.constant 0 : index
    %c0_52 = arith.constant 0 : index
    %c0_53 = arith.constant 0 : index
    %40 = vector.load %arg6[%c0_51, %c0_52, %c0_53] : memref<1x1x128xf32, #tpu.memory_space<vmem>>, vector<1x1x128xf32>
    %cst_54 = arith.constant dense<0.000000e+00> : vector<128xf32>
    %41 = vector.multi_reduction <add>, %37, %cst_54 [0] : vector<128x128xf32> to vector<128xf32>
    %42 = vector.shape_cast %41 : vector<128xf32> to vector<1x128xf32>
    %43 = vector.shape_cast %42 : vector<1x128xf32> to vector<1x1x128xf32>
    %44 = arith.addf %40, %43 : vector<1x1x128xf32>
    %c0_55 = arith.constant 0 : index
    %c0_56 = arith.constant 0 : index
    %c0_57 = arith.constant 0 : index
    %45 = vector.load %arg6[%c0_55, %c0_56, %c0_57] : memref<1x1x128xf32, #tpu.memory_space<vmem>>, vector<1x1x128xf32>
    tpu.vector_store %arg6[%c0_55, %c0_56, %c0_57], %44 {strides = array<i32>} : memref<1x1x128xf32, #tpu.memory_space<vmem>>, vector<1x1x128xf32>,
    %c1_i32 = arith.constant 1 : i32
    %46 = arith.cmpi eq, %arg1, %c1_i32 : i32
    %47 = arith.extui %46 : i1 to i32
    %c0_i32_58 = arith.constant 0 : i32
    %48 = arith.cmpi ne, %47, %c0_i32_58 : i32
    scf.if %48 {
      %c0_59 = arith.constant 0 : index
      %c0_60 = arith.constant 0 : index
      %c0_61 = arith.constant 0 : index
      %49 = vector.load %arg6[%c0_59, %c0_60, %c0_61] : memref<1x1x128xf32, #tpu.memory_space<vmem>>, vector<1x1x128xf32>
      %cst_62 = arith.constant 3.906250e-03 : f32
      %50 = vector.broadcast %cst_62 : f32 to vector<1x1x128xf32>
      %51 = arith.mulf %49, %50 : vector<1x1x128xf32>
      %c0_63 = arith.constant 0 : index
      %c0_64 = arith.constant 0 : index
      %c0_65 = arith.constant 0 : index
      %52 = vector.load %arg6[%c0_63, %c0_64, %c0_65] : memref<1x1x128xf32, #tpu.memory_space<vmem>>, vector<1x1x128xf32>
      tpu.vector_store %arg6[%c0_63, %c0_64, %c0_65], %51 {strides = array<i32>} : memref<1x1x128xf32, #tpu.memory_space<vmem>>, vector<1x1x128xf32>,
    } else {
    }
    return
  }
  func.func @transform_0(%arg0: i32, %arg1: i32) -> (i32, i32, i32, i32, i32) {
    %c0_i32 = arith.constant 0 : i32
    %c0_i32_0 = arith.constant 0 : i32
    %c0_i32_1 = arith.constant 0 : i32
    %c0_i32_2 = arith.constant 0 : i32
    return %arg0, %arg1, %c0_i32, %c0_i32_0, %c0_i32_1 : i32, i32, i32, i32, i32
  }
  func.func @transform_1(%arg0: i32, %arg1: i32) -> (i32, i32) {
    %c0_i32 = arith.constant 0 : i32
    %c0_i32_0 = arith.constant 0 : i32
    %c0_i32_1 = arith.constant 0 : i32
    return %c0_i32, %c0_i32_0 : i32, i32
  }
  func.func @transform_2(%arg0: i32, %arg1: i32) -> (i32, i32) {
    %c0_i32 = arith.constant 0 : i32
    %c0_i32_0 = arith.constant 0 : i32
    %c0_i32_1 = arith.constant 0 : i32
    return %c0_i32, %c0_i32_0 : i32, i32
  }
  func.func @transform_3(%arg0: i32, %arg1: i32) -> (i32, i32, i32) {
    %c0_i32 = arith.constant 0 : i32
    %c0_i32_0 = arith.constant 0 : i32
    return %arg0, %arg1, %c0_i32 : i32, i32, i32
  }
  func.func @transform_4(%arg0: i32, %arg1: i32) -> (i32, i32, i32) {
    %c0_i32 = arith.constant 0 : i32
    %c0_i32_0 = arith.constant 0 : i32
    %c0_i32_1 = arith.constant 0 : i32
    return %arg0, %c0_i32, %c0_i32_0 : i32, i32, i32
  }
}

</mosaic_0001>

<llo_original>
// kernel: tpu_custom_call.1
$region0: #{tpu_custom_call.1}
  #allocation0 [shape = 'u32[]', space=smem, size = 0x4, offset = 0x4, fixed_abs, tag = 'smem constant byte address 0x4 - core index']
  #allocation1 [shape = 'u32[72,128]{1,0:T(1,128)}', space=vmem, size = 0x9000, scoped, tag = 'internal scratch']
  %s0 = inlined_call_operand.vmem [shape: f32[2,2,10,18,8], index: 0, kind: input, shape index: {}]
  %s1 = inlined_call_operand.vmem [shape: f32[72,128], index: 1, kind: input, shape index: {}]
  %s2 = inlined_call_operand.vmem [shape: f32[1,128], index: 2, kind: input, shape index: {}]
  %s3 = inlined_call_operand.hbm [shape: f32[2,256,128], index: 3, kind: output, shape index: {0}]
  %s4 = inlined_call_operand.hbm [shape: f32[2,1,128], index: 4, kind: output, shape index: {1}]
  %5 = xla_tuple %s3, %s4
  %s6 = sld [smem:[#allocation0]]
  $region61: #{tpu_custom_call.1} parent=0
    _
  %s8 = ssub.s32 1, %s6
  %s9 = scalar_select 0, %s8, %s6
  $region1: #{tpu_custom_call.1} parent=0
    #allocation2 [shape = 'u8[131072]{0}', space=vmem, size = 0x20000, scoped, tag = 'output window, operand 0']
    #allocation3 [shape = 's32[2]{0}', space=sflag, size = 0x8, scoped, tag = 'scoped memory for tpu_custom_call.1']
    #allocation4 [shape = 'u8[1024]{0}', space=vmem, size = 0x400, scoped, tag = 'output window, operand 1']
    #allocation5 [shape = 's32[2]{0}', space=sflag, size = 0x8, scoped, tag = 'scoped memory for tpu_custom_call.1']
    %10 = vsyncpa [#allocation3], 0
    %s11 = scalar_lea.sflag [#allocation3], 1
    %12 = vsyncpa %s11, 0
    %13 = vsyncpa [#allocation5], 0
    %s14 = scalar_lea.sflag [#allocation5], 1
    %15 = vsyncpa %s14, 0
    loop: start=0, step=1, limit=6
    $region2: #{tpu_custom_call.1} parent=1 // loop_pre_header
      _
    $region3: #{tpu_custom_call.1} parent=1 // loop_header
      %s17 = sphi 0, %s21
      %p18 = scmp.ge.s32.totalorder %s17, 6
      %s24 = sphi 0, %s36
      %s25 = sphi 0, %s32
      %s26 = sphi 0, %s24
      %s27 = sphi 0, %s25
      %s28 = sphi 0, %s26
      %s29 = sphi 0, %s27
      %s41 = sphi 0, %s43
      %s44 = sphi 0, %s41
      %s45 = sphi 0, %s44
      %s61 = sphi 0, %s45
      %s65 = sphi 0, %s65
      %s67 = sphi 0, %s65
      %s68 = sphi 0, %s67
      %s82 = sphi 0, %s68
      %s86 = sphi 0, %s86
      %s88 = sphi 0, %s86
      %s89 = sphi 0, %s88
      %s103 = sphi 0, %s89
      %s111 = sphi 0, %s113
      %s114 = sphi 0, %s111
      %s115 = sphi 0, %s114
      %s131 = sphi 0, %s115
      %s137 = sphi 0, %s139
      %s140 = sphi 0, %s137
      %s141 = sphi 0, %s140
      %s157 = sphi 0, %s141
    $region4: #{tpu_custom_call.1} parent=1 // loop_header_branch
      %20 = sbr.rel (%p18) target = $region8
    $region5: #{tpu_custom_call.1} parent=1 // loop_body
      %s22 = ssub.s32 %s17, 1
      %s23 = ssub.s32 %s17, 2
      %s30 = sadd.s32 1, %s25
      %p31 = scmp.ge.s32.totalorder %s30, 2
      %s32 = scalar_select %p31, 0, %s30
      %s33 = sadd.s32 1, %s24
      %s34 = scalar_select %p31, %s33, %s24
      %p35 = scmp.ge.s32.totalorder %s34, 2
      %s36 = scalar_select %p35, 0, %s34
      %s37 = ssub.s32 %s24, %s36
      %s38 = ssub.s32 %s25, %s32
      %s39 = sor.u32 %s37, %s38
      %p40 = scmp.eq.s32.totalorder %s39, 0
      %s42 = sadd.s32 %s41, 1
      %s43 = scalar_select %p40, %s41, %s42
      %p46 = pneg %p40
      %p47 = scmp.eq.s32.totalorder %s17, 3
      %p48 = por %p46, %p47
      %p49 = scmp.ne.s32.totalorder %s41, %s44
      %p50 = scmp.eq.s32.totalorder %s17, 0
      %p51 = por %p49, %p50
      %p52 = scmp.ne.s32.totalorder %s41, %s44
      %p53 = scmp.eq.s32.totalorder %s22, 3
      %p54 = por %p52, %p53
      %p55 = scmp.ne.s32.totalorder %s44, %s45
      %p56 = scmp.eq.s32.totalorder %s22, 0
      %p57 = por %p55, %p56
      %p58 = scmp.ne.s32.totalorder %s44, %s45
      %p59 = scmp.eq.s32.totalorder %s23, 3
      %p60 = por %p58, %p59
      %p62 = scmp.ne.s32.totalorder %s45, %s61
      %p63 = scmp.eq.s32.totalorder %s23, 0
      %p64 = por %p62, %p63
      %s66 = sadd.s32 %s65, 1
      %p69 = scmp.eq.s32.totalorder %s17, 3
      %p70 = scmp.ne.s32.totalorder %s65, %s67
      %p71 = scmp.eq.s32.totalorder %s17, 0
      %p72 = por %p70, %p71
      %p73 = scmp.ne.s32.totalorder %s65, %s67
      %p74 = scmp.eq.s32.totalorder %s22, 3
      %p75 = por %p73, %p74
      %p76 = scmp.ne.s32.totalorder %s67, %s68
      %p77 = scmp.eq.s32.totalorder %s22, 0
      %p78 = por %p76, %p77
      %p79 = scmp.ne.s32.totalorder %s67, %s68
      %p80 = scmp.eq.s32.totalorder %s23, 3
      %p81 = por %p79, %p80
      %p83 = scmp.ne.s32.totalorder %s68, %s82
      %p84 = scmp.eq.s32.totalorder %s23, 0
      %p85 = por %p83, %p84
      %s87 = sadd.s32 %s86, 1
      %p90 = scmp.eq.s32.totalorder %s17, 3
      %p91 = scmp.ne.s32.totalorder %s86, %s88
      %p92 = scmp.eq.s32.totalorder %s17, 0
      %p93 = por %p91, %p92
      %p94 = scmp.ne.s32.totalorder %s86, %s88
      %p95 = scmp.eq.s32.totalorder %s22, 3
      %p96 = por %p94, %p95
      %p97 = scmp.ne.s32.totalorder %s88, %s89
      %p98 = scmp.eq.s32.totalorder %s22, 0
      %p99 = por %p97, %p98
      %p100 = scmp.ne.s32.totalorder %s88, %s89
      %p101 = scmp.eq.s32.totalorder %s23, 3
      %p102 = por %p100, %p101
      %p104 = scmp.ne.s32.totalorder %s89, %s103
      %p105 = scmp.eq.s32.totalorder %s23, 0
      %p106 = por %p104, %p105
      %s107 = ssub.s32 %s24, %s36
      %s108 = ssub.s32 %s25, %s32
      %s109 = sor.u32 %s107, %s108
      %p110 = scmp.eq.s32.totalorder %s109, 0
      %s112 = sadd.s32 %s111, 1
      %s113 = scalar_select %p110, %s111, %s112
      %p116 = pneg %p110
      %p117 = scmp.eq.s32.totalorder %s17, 3
      %p118 = por %p116, %p117
      %p119 = scmp.ne.s32.totalorder %s111, %s114
      %p120 = scmp.eq.s32.totalorder %s17, 0
      %p121 = por %p119, %p120
      %p122 = scmp.ne.s32.totalorder %s111, %s114
      %p123 = scmp.eq.s32.totalorder %s22, 3
      %p124 = por %p122, %p123
      %p125 = scmp.ne.s32.totalorder %s114, %s115
      %p126 = scmp.eq.s32.totalorder %s22, 0
      %p127 = por %p125, %p126
      %p128 = scmp.ne.s32.totalorder %s114, %s115
      %p129 = scmp.eq.s32.totalorder %s23, 3
      %p130 = por %p128, %p129
      %p132 = scmp.ne.s32.totalorder %s115, %s131
      %p133 = scmp.eq.s32.totalorder %s23, 0
      %p134 = por %p132, %p133
      %s135 = ssub.s32 %s24, %s36
      %p136 = scmp.eq.s32.totalorder %s135, 0
      %s138 = sadd.s32 %s137, 1
      %s139 = scalar_select %p136, %s137, %s138
      %p142 = pneg %p136
      %p143 = scmp.eq.s32.totalorder %s17, 3
      %p144 = por %p142, %p143
      %p145 = scmp.ne.s32.totalorder %s137, %s140
      %p146 = scmp.eq.s32.totalorder %s17, 0
      %p147 = por %p145, %p146
      %p148 = scmp.ne.s32.totalorder %s137, %s140
      %p149 = scmp.eq.s32.totalorder %s22, 3
      %p150 = por %p148, %p149
      %p151 = scmp.ne.s32.totalorder %s140, %s141
      %p152 = scmp.eq.s32.totalorder %s22, 0
      %p153 = por %p151, %p152
      %p154 = scmp.ne.s32.totalorder %s140, %s141
      %p155 = scmp.eq.s32.totalorder %s23, 3
      %p156 = por %p154, %p155
      %p158 = scmp.ne.s32.totalorder %s141, %s157
      %p159 = scmp.eq.s32.totalorder %s23, 0
      %p160 = por %p158, %p159
      %p161 = scmp.le.s32.totalorder 1, %s17
      %p162 = scmp.lt.s32.totalorder %s17, 5
      %p163 = pnand %p161, %p162
      %p164 = pneg %p163
      // Predicated region
      $region9: #{tpu_custom_call.1} parent=5 // pred_check
        _
      $region10: #{tpu_custom_call.1} parent=5 // pred_check_branch
        %166 = sbr.rel (%p163) target = $region12
      $region11: #{tpu_custom_call.1} parent=5 // pred_region
        %s167 = ssub.s32 %s17, 1
        // Predicated region
        $region13: #{tpu_custom_call.1} parent=11 // pred_check
          %p168 = pneg %p78
        $region14: #{tpu_custom_call.1} parent=11 // pred_check_branch
          %170 = sbr.rel (%p168) target = $region16
        $region15: #{tpu_custom_call.1} parent=11 // pred_region
          _
        $region16: #{tpu_custom_call.1} parent=11 // pred_fallthru
          _
        // Predicated region
        $region17: #{tpu_custom_call.1} parent=11 // pred_check
          %p171 = pneg %p99
        $region18: #{tpu_custom_call.1} parent=11 // pred_check_branch
          %173 = sbr.rel (%p171) target = $region20
        $region19: #{tpu_custom_call.1} parent=11 // pred_region
          _
        $region20: #{tpu_custom_call.1} parent=11 // pred_fallthru
          _
      $region12: #{tpu_custom_call.1} parent=5 // pred_fallthru
        _
      %p174 = scmp.lt.s32.totalorder %s17, 4
      // Predicated region
      $region21: #{tpu_custom_call.1} parent=5 // pred_check
        %p175 = pneg %p174
      $region22: #{tpu_custom_call.1} parent=5 // pred_check_branch
        %177 = sbr.rel (%p175) target = $region24
      $region23: #{tpu_custom_call.1} parent=5 // pred_region
        // Predicated region
        $region25: #{tpu_custom_call.1} parent=23 // pred_check
          %p178 = pneg %p51
        $region26: #{tpu_custom_call.1} parent=23 // pred_check_branch
          %180 = sbr.rel (%p178) target = $region28
        $region27: #{tpu_custom_call.1} parent=23 // pred_region
          %p181 = scmp.lt.s32.totalorder %s24, 1
          %s182 = scalar_select %p181, %s24, 1
          %p183 = scmp.lt.s32.totalorder %s25, 1
          %s184 = scalar_select %p183, %s25, 1
          %s185 = smul.addr %s184, 30
          %s186 = smul.addr %s182, 60
          %s187 = sadd.s32 %s185, %s186
          %s188 = smul.addr %s187, 8
          %s189 = scalar_lea.vmem %s0, %s188
        $region28: #{tpu_custom_call.1} parent=23 // pred_fallthru
          _
      $region24: #{tpu_custom_call.1} parent=5 // pred_fallthru
        _
      %p190 = scmp.le.s32.totalorder 1, %s17
      %p191 = scmp.lt.s32.totalorder %s17, 5
      %p192 = pnand %p190, %p191
      %p193 = pneg %p192
      // Predicated region
      $region29: #{tpu_custom_call.1} parent=5 // pred_check
        _
      $region30: #{tpu_custom_call.1} parent=5 // pred_check_branch
        %195 = sbr.rel (%p192) target = $region32
      $region31: #{tpu_custom_call.1} parent=5 // pred_region
        %s196 = ssub.s32 %s17, 1
        %p197 = scmp.lt.s32.totalorder %s26, 1
        %s198 = scalar_select %p197, %s26, 1
        %p199 = scmp.lt.s32.totalorder %s27, 1
        %s200 = scalar_select %p199, %s27, 1
        %s201 = smul.addr %s200, 30
        %s202 = smul.addr %s198, 60
        %s203 = sadd.s32 %s201, %s202
        %s204 = smul.addr %s203, 8
        %s205 = scalar_lea.vmem %s0, %s204
        %p206 = pneg %p57
        %p207 = pneg %p54
        %p208 = pneg %p78
        %p209 = pneg %p75
        %p210 = pneg %p99
        %p211 = pneg %p96
        %p212 = pneg %p127
        %p213 = pneg %p124
        %s214 = sand.u32 %s114, 1
        %s215 = scalar_lea.sflag [#allocation3], %s214
        %s216 = sand.u32 %s114, 1
        %s217 = smul.addr %s216, 128
        %s218 = scalar_lea.vmem [#allocation2], %s217
        %p219 = pneg %p153
        %p220 = pneg %p150
        %s221 = sand.u32 %s140, 1
        %s222 = scalar_lea.sflag [#allocation5], %s221
        %s223 = sand.u32 %s140, 1
        %s224 = scalar_lea.vmem [#allocation4], %s223
        %p225 = scmp.lt.s32.totalorder %s26, 1
        %s226 = scalar_select %p225, %s26, 1
        %p227 = scmp.lt.s32.totalorder %s27, 1
        %s228 = scalar_select %p227, %s27, 1
        %s229 = smul.addr %s228, 30
        %s230 = smul.addr %s226, 60
        %s231 = sadd.s32 %s229, %s230
        %s232 = smul.addr %s231, 8
        %s233 = scalar_lea.vmem %s0, %s232
        %s234 = smul.u32 16, %s27
        %p235 = scmp.eq.s32.totalorder %s27, 0
        // Predicated region
        $region33: #{tpu_custom_call.1} parent=31 // pred_check
          %p236 = pneg %p235
        $region34: #{tpu_custom_call.1} parent=31 // pred_check_branch
          %238 = sbr.rel (%p236) target = $region36
        $region35: #{tpu_custom_call.1} parent=31 // pred_region
          %239 = vst [vmem:[%s224] sm:$0x1] 0.0
        $region36: #{tpu_custom_call.1} parent=31 // pred_fallthru
          _
        %v240 = vld [vmem:[%s233] sm:$0xff]
        %v241 = vld [vmem:[%s233 + $0x8] sm:$0xff]
        %v242 = vld [vmem:[%s233 + $0x18] sm:$0xff]
        %v243 = vld [vmem:[%s233 + $0x20] sm:$0xff]
        %v244 = vld [vmem:[%s233 + $0x30] sm:$0xff]
        %v245 = vld [vmem:[%s233 + $0x38] sm:$0xff]
        %v246 = vld [vmem:[%s233 + $0x48] sm:$0xff]
        %v247 = vld [vmem:[%s233 + $0x50] sm:$0xff]
        %v248 = vld [vmem:[%s233 + $0x60] sm:$0xff]
        %v249 = vld [vmem:[%s233 + $0x68] sm:$0xff]
        %v250 = vld [vmem:[%s233 + $0x78] sm:$0xff]
        %v251 = vld [vmem:[%s233 + $0x80] sm:$0xff]
        %v252 = vld [vmem:[%s233 + $0x90] sm:$0xff]
        %v253 = vld [vmem:[%s233 + $0x98] sm:$0xff]
        %v254 = vld [vmem:[%s233 + $0xa8] sm:$0xff]
        %v255 = vld [vmem:[%s233 + $0xb0] sm:$0xff]
        %v256 = vld [vmem:[%s233 + $0x1] sm:$0xff]
        %v257 = vld [vmem:[%s233 + $0x9] sm:$0xff]
        %v258 = vld [vmem:[%s233 + $0x19] sm:$0xff]
        %v259 = vld [vmem:[%s233 + $0x21] sm:$0xff]
        %v260 = vld [vmem:[%s233 + $0x31] sm:$0xff]
        %v261 = vld [vmem:[%s233 + $0x39] sm:$0xff]
        %v262 = vld [vmem:[%s233 + $0x49] sm:$0xff]
        %v263 = vld [vmem:[%s233 + $0x51] sm:$0xff]
        %v264 = vld [vmem:[%s233 + $0x61] sm:$0xff]
        %v265 = vld [vmem:[%s233 + $0x69] sm:$0xff]
        %v266 = vld [vmem:[%s233 + $0x79] sm:$0xff]
        %v267 = vld [vmem:[%s233 + $0x81] sm:$0xff]
        %v268 = vld [vmem:[%s233 + $0x91] sm:$0xff]
        %v269 = vld [vmem:[%s233 + $0x99] sm:$0xff]
        %v270 = vld [vmem:[%s233 + $0xa9] sm:$0xff]
        %v271 = vld [vmem:[%s233 + $0xb1] sm:$0xff]
        %v272 = vld [vmem:[%s233 + $0x2] sm:$0xff]
        %v273 = vld [vmem:[%s233 + $0xa] sm:$0xff]
        %v274 = vld [vmem:[%s233 + $0x1a] sm:$0xff]
        %v275 = vld [vmem:[%s233 + $0x22] sm:$0xff]
        %v276 = vld [vmem:[%s233 + $0x32] sm:$0xff]
        %v277 = vld [vmem:[%s233 + $0x3a] sm:$0xff]
        %v278 = vld [vmem:[%s233 + $0x4a] sm:$0xff]
        %v279 = vld [vmem:[%s233 + $0x52] sm:$0xff]
        %v280 = vld [vmem:[%s233 + $0x62] sm:$0xff]
        %v281 = vld [vmem:[%s233 + $0x6a] sm:$0xff]
        %v282 = vld [vmem:[%s233 + $0x7a] sm:$0xff]
        %v283 = vld [vmem:[%s233 + $0x82] sm:$0xff]
        %v284 = vld [vmem:[%s233 + $0x92] sm:$0xff]
        %v285 = vld [vmem:[%s233 + $0x9a] sm:$0xff]
        %v286 = vld [vmem:[%s233 + $0xaa] sm:$0xff]
        %v287 = vld [vmem:[%s233 + $0xb2] sm:$0xff]
        %s288 = scalar_lea.vmem %s233, 24
        %v289 = vld [vmem:[%s288] sm:$0xff]
        %v290 = vld [vmem:[%s288 + $0x8] sm:$0xff]
        %v291 = vld [vmem:[%s288 + $0x18] sm:$0xff]
        %v292 = vld [vmem:[%s288 + $0x20] sm:$0xff]
        %v293 = vld [vmem:[%s288 + $0x30] sm:$0xff]
        %v294 = vld [vmem:[%s288 + $0x38] sm:$0xff]
        %v295 = vld [vmem:[%s288 + $0x48] sm:$0xff]
        %v296 = vld [vmem:[%s288 + $0x50] sm:$0xff]
        %v297 = vld [vmem:[%s288 + $0x60] sm:$0xff]
        %v298 = vld [vmem:[%s288 + $0x68] sm:$0xff]
        %v299 = vld [vmem:[%s288 + $0x78] sm:$0xff]
        %v300 = vld [vmem:[%s288 + $0x80] sm:$0xff]
        %v301 = vld [vmem:[%s288 + $0x90] sm:$0xff]
        %v302 = vld [vmem:[%s288 + $0x98] sm:$0xff]
        %v303 = vld [vmem:[%s288 + $0xa8] sm:$0xff]
        %v304 = vld [vmem:[%s288 + $0xb0] sm:$0xff]
        %v305 = vld [vmem:[%s288 + $0x1] sm:$0xff]
        %v306 = vld [vmem:[%s288 + $0x9] sm:$0xff]
        %v307 = vld [vmem:[%s288 + $0x19] sm:$0xff]
        %v308 = vld [vmem:[%s288 + $0x21] sm:$0xff]
        %v309 = vld [vmem:[%s288 + $0x31] sm:$0xff]
        %v310 = vld [vmem:[%s288 + $0x39] sm:$0xff]
        %v311 = vld [vmem:[%s288 + $0x49] sm:$0xff]
        %v312 = vld [vmem:[%s288 + $0x51] sm:$0xff]
        %v313 = vld [vmem:[%s288 + $0x61] sm:$0xff]
        %v314 = vld [vmem:[%s288 + $0x69] sm:$0xff]
        %v315 = vld [vmem:[%s288 + $0x79] sm:$0xff]
        %v316 = vld [vmem:[%s288 + $0x81] sm:$0xff]
        %v317 = vld [vmem:[%s288 + $0x91] sm:$0xff]
        %v318 = vld [vmem:[%s288 + $0x99] sm:$0xff]
        %v319 = vld [vmem:[%s288 + $0xa9] sm:$0xff]
        %v320 = vld [vmem:[%s288 + $0xb1] sm:$0xff]
        %v321 = vld [vmem:[%s288 + $0x2] sm:$0xff]
        %v322 = vld [vmem:[%s288 + $0xa] sm:$0xff]
        %v323 = vld [vmem:[%s288 + $0x1a] sm:$0xff]
        %v324 = vld [vmem:[%s288 + $0x22] sm:$0xff]
        %v325 = vld [vmem:[%s288 + $0x32] sm:$0xff]
        %v326 = vld [vmem:[%s288 + $0x3a] sm:$0xff]
        %v327 = vld [vmem:[%s288 + $0x4a] sm:$0xff]
        %v328 = vld [vmem:[%s288 + $0x52] sm:$0xff]
        %v329 = vld [vmem:[%s288 + $0x62] sm:$0xff]
        %v330 = vld [vmem:[%s288 + $0x6a] sm:$0xff]
        %v331 = vld [vmem:[%s288 + $0x7a] sm:$0xff]
        %v332 = vld [vmem:[%s288 + $0x82] sm:$0xff]
        %v333 = vld [vmem:[%s288 + $0x92] sm:$0xff]
        %v334 = vld [vmem:[%s288 + $0x9a] sm:$0xff]
        %v335 = vld [vmem:[%s288 + $0xaa] sm:$0xff]
        %v336 = vld [vmem:[%s288 + $0xb2] sm:$0xff]
        %s337 = scalar_lea.vmem %s233, 48
        %v338 = vld [vmem:[%s337] sm:$0xff]
        %v339 = vld [vmem:[%s337 + $0x8] sm:$0xff]
        %v340 = vld [vmem:[%s337 + $0x18] sm:$0xff]
        %v341 = vld [vmem:[%s337 + $0x20] sm:$0xff]
        %v342 = vld [vmem:[%s337 + $0x30] sm:$0xff]
        %v343 = vld [vmem:[%s337 + $0x38] sm:$0xff]
        %v344 = vld [vmem:[%s337 + $0x48] sm:$0xff]
        %v345 = vld [vmem:[%s337 + $0x50] sm:$0xff]
        %v346 = vld [vmem:[%s337 + $0x60] sm:$0xff]
        %v347 = vld [vmem:[%s337 + $0x68] sm:$0xff]
        %v348 = vld [vmem:[%s337 + $0x78] sm:$0xff]
        %v349 = vld [vmem:[%s337 + $0x80] sm:$0xff]
        %v350 = vld [vmem:[%s337 + $0x90] sm:$0xff]
        %v351 = vld [vmem:[%s337 + $0x98] sm:$0xff]
        %v352 = vld [vmem:[%s337 + $0xa8] sm:$0xff]
        %v353 = vld [vmem:[%s337 + $0xb0] sm:$0xff]
        %v354 = vld [vmem:[%s337 + $0x1] sm:$0xff]
        %v355 = vld [vmem:[%s337 + $0x9] sm:$0xff]
        %v356 = vld [vmem:[%s337 + $0x19] sm:$0xff]
        %v357 = vld [vmem:[%s337 + $0x21] sm:$0xff]
        %v358 = vld [vmem:[%s337 + $0x31] sm:$0xff]
        %v359 = vld [vmem:[%s337 + $0x39] sm:$0xff]
        %v360 = vld [vmem:[%s337 + $0x49] sm:$0xff]
        %v361 = vld [vmem:[%s337 + $0x51] sm:$0xff]
        %v362 = vld [vmem:[%s337 + $0x61] sm:$0xff]
        %v363 = vld [vmem:[%s337 + $0x69] sm:$0xff]
        %v364 = vld [vmem:[%s337 + $0x79] sm:$0xff]
        %v365 = vld [vmem:[%s337 + $0x81] sm:$0xff]
        %v366 = vld [vmem:[%s337 + $0x91] sm:$0xff]
        %v367 = vld [vmem:[%s337 + $0x99] sm:$0xff]
        %v368 = vld [vmem:[%s337 + $0xa9] sm:$0xff]
        %v369 = vld [vmem:[%s337 + $0xb1] sm:$0xff]
        %v370 = vld [vmem:[%s337 + $0x2] sm:$0xff]
        %v371 = vld [vmem:[%s337 + $0xa] sm:$0xff]
        %v372 = vld [vmem:[%s337 + $0x1a] sm:$0xff]
        %v373 = vld [vmem:[%s337 + $0x22] sm:$0xff]
        %v374 = vld [vmem:[%s337 + $0x32] sm:$0xff]
        %v375 = vld [vmem:[%s337 + $0x3a] sm:$0xff]
        %v376 = vld [vmem:[%s337 + $0x4a] sm:$0xff]
        %v377 = vld [vmem:[%s337 + $0x52] sm:$0xff]
        %v378 = vld [vmem:[%s337 + $0x62] sm:$0xff]
        %v379 = vld [vmem:[%s337 + $0x6a] sm:$0xff]
        %v380 = vld [vmem:[%s337 + $0x7a] sm:$0xff]
        %v381 = vld [vmem:[%s337 + $0x82] sm:$0xff]
        %v382 = vld [vmem:[%s337 + $0x92] sm:$0xff]
        %v383 = vld [vmem:[%s337 + $0x9a] sm:$0xff]
        %v384 = vld [vmem:[%s337 + $0xaa] sm:$0xff]
        %v385 = vld [vmem:[%s337 + $0xb2] sm:$0xff]
        %402 = vrot.lane.b32.xlu0 %v256, 8
        %v403 = vpop.permute.xlu0 %402
        %404 = vrot.lane.b32.xlu0 %v257, 8
        %v405 = vpop.permute.xlu0 %404
        %406 = vrot.lane.b32.xlu0 %v258, 8
        %v407 = vpop.permute.xlu0 %406
        %408 = vrot.lane.b32.xlu0 %v259, 8
        %v409 = vpop.permute.xlu0 %408
        %410 = vrot.lane.b32.xlu0 %v260, 8
        %v411 = vpop.permute.xlu0 %410
        %412 = vrot.lane.b32.xlu0 %v261, 8
        %v413 = vpop.permute.xlu0 %412
        %414 = vrot.lane.b32.xlu0 %v262, 8
        %v415 = vpop.permute.xlu0 %414
        %416 = vrot.lane.b32.xlu0 %v263, 8
        %v417 = vpop.permute.xlu0 %416
        %418 = vrot.lane.b32.xlu0 %v264, 8
        %v419 = vpop.permute.xlu0 %418
        %420 = vrot.lane.b32.xlu0 %v265, 8
        %v421 = vpop.permute.xlu0 %420
        %422 = vrot.lane.b32.xlu0 %v266, 8
        %v423 = vpop.permute.xlu0 %422
        %424 = vrot.lane.b32.xlu0 %v267, 8
        %v425 = vpop.permute.xlu0 %424
        %426 = vrot.lane.b32.xlu0 %v268, 8
        %v427 = vpop.permute.xlu0 %426
        %428 = vrot.lane.b32.xlu0 %v269, 8
        %v429 = vpop.permute.xlu0 %428
        %430 = vrot.lane.b32.xlu0 %v270, 8
        %v431 = vpop.permute.xlu0 %430
        %432 = vrot.lane.b32.xlu0 %v271, 8
        %v433 = vpop.permute.xlu0 %432
        %466 = vrot.lane.b32.xlu0 %v272, 16
        %v467 = vpop.permute.xlu0 %466
        %468 = vrot.lane.b32.xlu0 %v273, 16
        %v469 = vpop.permute.xlu0 %468
        %470 = vrot.lane.b32.xlu0 %v274, 16
        %v471 = vpop.permute.xlu0 %470
        %472 = vrot.lane.b32.xlu0 %v275, 16
        %v473 = vpop.permute.xlu0 %472
        %474 = vrot.lane.b32.xlu0 %v276, 16
        %v475 = vpop.permute.xlu0 %474
        %476 = vrot.lane.b32.xlu0 %v277, 16
        %v477 = vpop.permute.xlu0 %476
        %478 = vrot.lane.b32.xlu0 %v278, 16
        %v479 = vpop.permute.xlu0 %478
        %480 = vrot.lane.b32.xlu0 %v279, 16
        %v481 = vpop.permute.xlu0 %480
        %482 = vrot.lane.b32.xlu0 %v280, 16
        %v483 = vpop.permute.xlu0 %482
        %484 = vrot.lane.b32.xlu0 %v281, 16
        %v485 = vpop.permute.xlu0 %484
        %486 = vrot.lane.b32.xlu0 %v282, 16
        %v487 = vpop.permute.xlu0 %486
        %488 = vrot.lane.b32.xlu0 %v283, 16
        %v489 = vpop.permute.xlu0 %488
        %490 = vrot.lane.b32.xlu0 %v284, 16
        %v491 = vpop.permute.xlu0 %490
        %492 = vrot.lane.b32.xlu0 %v285, 16
        %v493 = vpop.permute.xlu0 %492
        %494 = vrot.lane.b32.xlu0 %v286, 16
        %v495 = vpop.permute.xlu0 %494
        %496 = vrot.lane.b32.xlu0 %v287, 16
        %v497 = vpop.permute.xlu0 %496
        %530 = vrot.lane.b32.xlu0 %v289, 24
        %v531 = vpop.permute.xlu0 %530
        %532 = vrot.lane.b32.xlu0 %v290, 24
        %v533 = vpop.permute.xlu0 %532
        %534 = vrot.lane.b32.xlu0 %v291, 24
        %v535 = vpop.permute.xlu0 %534
        %536 = vrot.lane.b32.xlu0 %v292, 24
        %v537 = vpop.permute.xlu0 %536
        %538 = vrot.lane.b32.xlu0 %v293, 24
        %v539 = vpop.permute.xlu0 %538
        %540 = vrot.lane.b32.xlu0 %v294, 24
        %v541 = vpop.permute.xlu0 %540
        %542 = vrot.lane.b32.xlu0 %v295, 24
        %v543 = vpop.permute.xlu0 %542
        %544 = vrot.lane.b32.xlu0 %v296, 24
        %v545 = vpop.permute.xlu0 %544
        %546 = vrot.lane.b32.xlu0 %v297, 24
        %v547 = vpop.permute.xlu0 %546
        %548 = vrot.lane.b32.xlu0 %v298, 24
        %v549 = vpop.permute.xlu0 %548
        %550 = vrot.lane.b32.xlu0 %v299, 24
        %v551 = vpop.permute.xlu0 %550
        %552 = vrot.lane.b32.xlu0 %v300, 24
        %v553 = vpop.permute.xlu0 %552
        %554 = vrot.lane.b32.xlu0 %v301, 24
        %v555 = vpop.permute.xlu0 %554
        %556 = vrot.lane.b32.xlu0 %v302, 24
        %v557 = vpop.permute.xlu0 %556
        %558 = vrot.lane.b32.xlu0 %v303, 24
        %v559 = vpop.permute.xlu0 %558
        %560 = vrot.lane.b32.xlu0 %v304, 24
        %v561 = vpop.permute.xlu0 %560
        %594 = vrot.lane.b32.xlu0 %v305, 32
        %v595 = vpop.permute.xlu0 %594
        %596 = vrot.lane.b32.xlu0 %v306, 32
        %v597 = vpop.permute.xlu0 %596
        %598 = vrot.lane.b32.xlu0 %v307, 32
        %v599 = vpop.permute.xlu0 %598
        %600 = vrot.lane.b32.xlu0 %v308, 32
        %v601 = vpop.permute.xlu0 %600
        %602 = vrot.lane.b32.xlu0 %v309, 32
        %v603 = vpop.permute.xlu0 %602
        %604 = vrot.lane.b32.xlu0 %v310, 32
        %v605 = vpop.permute.xlu0 %604
        %606 = vrot.lane.b32.xlu0 %v311, 32
        %v607 = vpop.permute.xlu0 %606
        %608 = vrot.lane.b32.xlu0 %v312, 32
        %v609 = vpop.permute.xlu0 %608
        %610 = vrot.lane.b32.xlu0 %v313, 32
        %v611 = vpop.permute.xlu0 %610
        %612 = vrot.lane.b32.xlu0 %v314, 32
        %v613 = vpop.permute.xlu0 %612
        %614 = vrot.lane.b32.xlu0 %v315, 32
        %v615 = vpop.permute.xlu0 %614
        %616 = vrot.lane.b32.xlu0 %v316, 32
        %v617 = vpop.permute.xlu0 %616
        %618 = vrot.lane.b32.xlu0 %v317, 32
        %v619 = vpop.permute.xlu0 %618
        %620 = vrot.lane.b32.xlu0 %v318, 32
        %v621 = vpop.permute.xlu0 %620
        %622 = vrot.lane.b32.xlu0 %v319, 32
        %v623 = vpop.permute.xlu0 %622
        %624 = vrot.lane.b32.xlu0 %v320, 32
        %v625 = vpop.permute.xlu0 %624
        %658 = vrot.lane.b32.xlu0 %v321, 40
        %v659 = vpop.permute.xlu0 %658
        %660 = vrot.lane.b32.xlu0 %v322, 40
        %v661 = vpop.permute.xlu0 %660
        %662 = vrot.lane.b32.xlu0 %v323, 40
        %v663 = vpop.permute.xlu0 %662
        %664 = vrot.lane.b32.xlu0 %v324, 40
        %v665 = vpop.permute.xlu0 %664
        %666 = vrot.lane.b32.xlu0 %v325, 40
        %v667 = vpop.permute.xlu0 %666
        %668 = vrot.lane.b32.xlu0 %v326, 40
        %v669 = vpop.permute.xlu0 %668
        %670 = vrot.lane.b32.xlu0 %v327, 40
        %v671 = vpop.permute.xlu0 %670
        %672 = vrot.lane.b32.xlu0 %v328, 40
        %v673 = vpop.permute.xlu0 %672
        %674 = vrot.lane.b32.xlu0 %v329, 40
        %v675 = vpop.permute.xlu0 %674
        %676 = vrot.lane.b32.xlu0 %v330, 40
        %v677 = vpop.permute.xlu0 %676
        %678 = vrot.lane.b32.xlu0 %v331, 40
        %v679 = vpop.permute.xlu0 %678
        %680 = vrot.lane.b32.xlu0 %v332, 40
        %v681 = vpop.permute.xlu0 %680
        %682 = vrot.lane.b32.xlu0 %v333, 40
        %v683 = vpop.permute.xlu0 %682
        %684 = vrot.lane.b32.xlu0 %v334, 40
        %v685 = vpop.permute.xlu0 %684
        %686 = vrot.lane.b32.xlu0 %v335, 40
        %v687 = vpop.permute.xlu0 %686
        %688 = vrot.lane.b32.xlu0 %v336, 40
        %v689 = vpop.permute.xlu0 %688
        %722 = vrot.lane.b32.xlu0 %v338, 48
        %v723 = vpop.permute.xlu0 %722
        %724 = vrot.lane.b32.xlu0 %v339, 48
        %v725 = vpop.permute.xlu0 %724
        %726 = vrot.lane.b32.xlu0 %v340, 48
        %v727 = vpop.permute.xlu0 %726
        %728 = vrot.lane.b32.xlu0 %v341, 48
        %v729 = vpop.permute.xlu0 %728
        %730 = vrot.lane.b32.xlu0 %v342, 48
        %v731 = vpop.permute.xlu0 %730
        %732 = vrot.lane.b32.xlu0 %v343, 48
        %v733 = vpop.permute.xlu0 %732
        %734 = vrot.lane.b32.xlu0 %v344, 48
        %v735 = vpop.permute.xlu0 %734
        %736 = vrot.lane.b32.xlu0 %v345, 48
        %v737 = vpop.permute.xlu0 %736
        %738 = vrot.lane.b32.xlu0 %v346, 48
        %v739 = vpop.permute.xlu0 %738
        %740 = vrot.lane.b32.xlu0 %v347, 48
        %v741 = vpop.permute.xlu0 %740
        %742 = vrot.lane.b32.xlu0 %v348, 48
        %v743 = vpop.permute.xlu0 %742
        %744 = vrot.lane.b32.xlu0 %v349, 48
        %v745 = vpop.permute.xlu0 %744
        %746 = vrot.lane.b32.xlu0 %v350, 48
        %v747 = vpop.permute.xlu0 %746
        %748 = vrot.lane.b32.xlu0 %v351, 48
        %v749 = vpop.permute.xlu0 %748
        %750 = vrot.lane.b32.xlu0 %v352, 48
        %v751 = vpop.permute.xlu0 %750
        %752 = vrot.lane.b32.xlu0 %v353, 48
        %v753 = vpop.permute.xlu0 %752
        %786 = vrot.lane.b32.xlu0 %v354, 56
        %v787 = vpop.permute.xlu0 %786
        %788 = vrot.lane.b32.xlu0 %v355, 56
        %v789 = vpop.permute.xlu0 %788
        %790 = vrot.lane.b32.xlu0 %v356, 56
        %v791 = vpop.permute.xlu0 %790
        %792 = vrot.lane.b32.xlu0 %v357, 56
        %v793 = vpop.permute.xlu0 %792
        %794 = vrot.lane.b32.xlu0 %v358, 56
        %v795 = vpop.permute.xlu0 %794
        %796 = vrot.lane.b32.xlu0 %v359, 56
        %v797 = vpop.permute.xlu0 %796
        %798 = vrot.lane.b32.xlu0 %v360, 56
        %v799 = vpop.permute.xlu0 %798
        %800 = vrot.lane.b32.xlu0 %v361, 56
        %v801 = vpop.permute.xlu0 %800
        %802 = vrot.lane.b32.xlu0 %v362, 56
        %v803 = vpop.permute.xlu0 %802
        %804 = vrot.lane.b32.xlu0 %v363, 56
        %v805 = vpop.permute.xlu0 %804
        %806 = vrot.lane.b32.xlu0 %v364, 56
        %v807 = vpop.permute.xlu0 %806
        %808 = vrot.lane.b32.xlu0 %v365, 56
        %v809 = vpop.permute.xlu0 %808
        %810 = vrot.lane.b32.xlu0 %v366, 56
        %v811 = vpop.permute.xlu0 %810
        %812 = vrot.lane.b32.xlu0 %v367, 56
        %v813 = vpop.permute.xlu0 %812
        %814 = vrot.lane.b32.xlu0 %v368, 56
        %v815 = vpop.permute.xlu0 %814
        %816 = vrot.lane.b32.xlu0 %v369, 56
        %v817 = vpop.permute.xlu0 %816
        %850 = vrot.lane.b32.xlu0 %v370, 64
        %v851 = vpop.permute.xlu0 %850
        %852 = vrot.lane.b32.xlu0 %v371, 64
        %v853 = vpop.permute.xlu0 %852
        %854 = vrot.lane.b32.xlu0 %v372, 64
        %v855 = vpop.permute.xlu0 %854
        %856 = vrot.lane.b32.xlu0 %v373, 64
        %v857 = vpop.permute.xlu0 %856
        %858 = vrot.lane.b32.xlu0 %v374, 64
        %v859 = vpop.permute.xlu0 %858
        %860 = vrot.lane.b32.xlu0 %v375, 64
        %v861 = vpop.permute.xlu0 %860
        %862 = vrot.lane.b32.xlu0 %v376, 64
        %v863 = vpop.permute.xlu0 %862
        %864 = vrot.lane.b32.xlu0 %v377, 64
        %v865 = vpop.permute.xlu0 %864
        %866 = vrot.lane.b32.xlu0 %v378, 64
        %v867 = vpop.permute.xlu0 %866
        %868 = vrot.lane.b32.xlu0 %v379, 64
        %v869 = vpop.permute.xlu0 %868
        %870 = vrot.lane.b32.xlu0 %v380, 64
        %v871 = vpop.permute.xlu0 %870
        %872 = vrot.lane.b32.xlu0 %v381, 64
        %v873 = vpop.permute.xlu0 %872
        %874 = vrot.lane.b32.xlu0 %v382, 64
        %v875 = vpop.permute.xlu0 %874
        %876 = vrot.lane.b32.xlu0 %v383, 64
        %v877 = vpop.permute.xlu0 %876
        %878 = vrot.lane.b32.xlu0 %v384, 64
        %v879 = vpop.permute.xlu0 %878
        %880 = vrot.lane.b32.xlu0 %v385, 64
        %v881 = vpop.permute.xlu0 %880
        %vm898 = vcmask 64512
        %v899 = vsel %vm898, %v240, %v403
        %v900 = vsel %vm898, %v241, %v405
        %v901 = vsel %vm898, %v242, %v407
        %v902 = vsel %vm898, %v243, %v409
        %v903 = vsel %vm898, %v244, %v411
        %v904 = vsel %vm898, %v245, %v413
        %v905 = vsel %vm898, %v246, %v415
        %v906 = vsel %vm898, %v247, %v417
        %v907 = vsel %vm898, %v248, %v419
        %v908 = vsel %vm898, %v249, %v421
        %v909 = vsel %vm898, %v250, %v423
        %v910 = vsel %vm898, %v251, %v425
        %v911 = vsel %vm898, %v252, %v427
        %v912 = vsel %vm898, %v253, %v429
        %v913 = vsel %vm898, %v254, %v431
        %v914 = vsel %vm898, %v255, %v433
        %vm915 = vcmask 130048
        %v916 = vsel %vm915, %v899, %v467
        %v917 = vsel %vm915, %v900, %v469
        %v918 = vsel %vm915, %v901, %v471
        %v919 = vsel %vm915, %v902, %v473
        %v920 = vsel %vm915, %v903, %v475
        %v921 = vsel %vm915, %v904, %v477
        %v922 = vsel %vm915, %v905, %v479
        %v923 = vsel %vm915, %v906, %v481
        %v924 = vsel %vm915, %v907, %v483
        %v925 = vsel %vm915, %v908, %v485
        %v926 = vsel %vm915, %v909, %v487
        %v927 = vsel %vm915, %v910, %v489
        %v928 = vsel %vm915, %v911, %v491
        %v929 = vsel %vm915, %v912, %v493
        %v930 = vsel %vm915, %v913, %v495
        %v931 = vsel %vm915, %v914, %v497
        %vm932 = vcmask 195584
        %v933 = vsel %vm932, %v916, %v531
        %v934 = vsel %vm932, %v917, %v533
        %v935 = vsel %vm932, %v918, %v535
        %v936 = vsel %vm932, %v919, %v537
        %v937 = vsel %vm932, %v920, %v539
        %v938 = vsel %vm932, %v921, %v541
        %v939 = vsel %vm932, %v922, %v543
        %v940 = vsel %vm932, %v923, %v545
        %v941 = vsel %vm932, %v924, %v547
        %v942 = vsel %vm932, %v925, %v549
        %v943 = vsel %vm932, %v926, %v551
        %v944 = vsel %vm932, %v927, %v553
        %v945 = vsel %vm932, %v928, %v555
        %v946 = vsel %vm932, %v929, %v557
        %v947 = vsel %vm932, %v930, %v559
        %v948 = vsel %vm932, %v931, %v561
        %vm949 = vcmask 261120
        %v950 = vsel %vm949, %v933, %v595
        %v951 = vsel %vm949, %v934, %v597
        %v952 = vsel %vm949, %v935, %v599
        %v953 = vsel %vm949, %v936, %v601
        %v954 = vsel %vm949, %v937, %v603
        %v955 = vsel %vm949, %v938, %v605
        %v956 = vsel %vm949, %v939, %v607
        %v957 = vsel %vm949, %v940, %v609
        %v958 = vsel %vm949, %v941, %v611
        %v959 = vsel %vm949, %v942, %v613
        %v960 = vsel %vm949, %v943, %v615
        %v961 = vsel %vm949, %v944, %v617
        %v962 = vsel %vm949, %v945, %v619
        %v963 = vsel %vm949, %v946, %v621
        %v964 = vsel %vm949, %v947, %v623
        %v965 = vsel %vm949, %v948, %v625
        %vm966 = vcmask 326656
        %v967 = vsel %vm966, %v950, %v659
        %v968 = vsel %vm966, %v951, %v661
        %v969 = vsel %vm966, %v952, %v663
        %v970 = vsel %vm966, %v953, %v665
        %v971 = vsel %vm966, %v954, %v667
        %v972 = vsel %vm966, %v955, %v669
        %v973 = vsel %vm966, %v956, %v671
        %v974 = vsel %vm966, %v957, %v673
        %v975 = vsel %vm966, %v958, %v675
        %v976 = vsel %vm966, %v959, %v677
        %v977 = vsel %vm966, %v960, %v679
        %v978 = vsel %vm966, %v961, %v681
        %v979 = vsel %vm966, %v962, %v683
        %v980 = vsel %vm966, %v963, %v685
        %v981 = vsel %vm966, %v964, %v687
        %v982 = vsel %vm966, %v965, %v689
        %vm983 = vcmask 392192
        %v984 = vsel %vm983, %v967, %v723
        %v985 = vsel %vm983, %v968, %v725
        %v986 = vsel %vm983, %v969, %v727
        %v987 = vsel %vm983, %v970, %v729
        %v988 = vsel %vm983, %v971, %v731
        %v989 = vsel %vm983, %v972, %v733
        %v990 = vsel %vm983, %v973, %v735
        %v991 = vsel %vm983, %v974, %v737
        %v992 = vsel %vm983, %v975, %v739
        %v993 = vsel %vm983, %v976, %v741
        %v994 = vsel %vm983, %v977, %v743
        %v995 = vsel %vm983, %v978, %v745
        %v996 = vsel %vm983, %v979, %v747
        %v997 = vsel %vm983, %v980, %v749
        %v998 = vsel %vm983, %v981, %v751
        %v999 = vsel %vm983, %v982, %v753
        %vm1000 = vcmask 457728
        %v1001 = vsel %vm1000, %v984, %v787
        %v1002 = vsel %vm1000, %v985, %v789
        %v1003 = vsel %vm1000, %v986, %v791
        %v1004 = vsel %vm1000, %v987, %v793
        %v1005 = vsel %vm1000, %v988, %v795
        %v1006 = vsel %vm1000, %v989, %v797
        %v1007 = vsel %vm1000, %v990, %v799
        %v1008 = vsel %vm1000, %v991, %v801
        %v1009 = vsel %vm1000, %v992, %v803
        %v1010 = vsel %vm1000, %v993, %v805
        %v1011 = vsel %vm1000, %v994, %v807
        %v1012 = vsel %vm1000, %v995, %v809
        %v1013 = vsel %vm1000, %v996, %v811
        %v1014 = vsel %vm1000, %v997, %v813
        %v1015 = vsel %vm1000, %v998, %v815
        %v1016 = vsel %vm1000, %v999, %v817
        %vm1017 = vcmask 523264
        %v1018 = vsel %vm1017, %v1001, %v851
        %v1019 = vsel %vm1017, %v1002, %v853
        %v1020 = vsel %vm1017, %v1003, %v855
        %v1021 = vsel %vm1017, %v1004, %v857
        %v1022 = vsel %vm1017, %v1005, %v859
        %v1023 = vsel %vm1017, %v1006, %v861
        %v1024 = vsel %vm1017, %v1007, %v863
        %v1025 = vsel %vm1017, %v1008, %v865
        %v1026 = vsel %vm1017, %v1009, %v867
        %v1027 = vsel %vm1017, %v1010, %v869
        %v1028 = vsel %vm1017, %v1011, %v871
        %v1029 = vsel %vm1017, %v1012, %v873
        %v1030 = vsel %vm1017, %v1013, %v875
        %v1031 = vsel %vm1017, %v1014, %v877
        %v1032 = vsel %vm1017, %v1015, %v879
        %v1033 = vsel %vm1017, %v1016, %v881
        %v1034 = vld [vmem:[%s1] sm:$0xff]
        %v1035 = vld [vmem:[%s1 + $0x8] sm:$0xff]
        %v1036 = vld [vmem:[%s1 + $0x10] sm:$0xff]
        %v1037 = vld [vmem:[%s1 + $0x18] sm:$0xff]
        %v1038 = vld [vmem:[%s1 + $0x20] sm:$0xff]
        %v1039 = vld [vmem:[%s1 + $0x28] sm:$0xff]
        %v1040 = vld [vmem:[%s1 + $0x30] sm:$0xff]
        %v1041 = vld [vmem:[%s1 + $0x38] sm:$0xff]
        %v1042 = vld [vmem:[%s1 + $0x40] sm:$0xff]
        %v1043 = vld [vmem:[%s2] sm:$0x1]
        %v1045 = vperm.slane %v1043, 0
        %vm1047 = vcmask 588800
        %v1049 = vsel %vm1047, %v1018, 0
        %v1052 = vsel %vm1047, %v1019, 0
        %v1055 = vsel %vm1047, %v1020, 0
        %v1058 = vsel %vm1047, %v1021, 0
        %v1061 = vsel %vm1047, %v1022, 0
        %v1064 = vsel %vm1047, %v1023, 0
        %v1067 = vsel %vm1047, %v1024, 0
        %v1070 = vsel %vm1047, %v1025, 0
        %v1073 = vsel %vm1047, %v1026, 0
        %v1076 = vsel %vm1047, %v1027, 0
        %v1079 = vsel %vm1047, %v1028, 0
        %v1082 = vsel %vm1047, %v1029, 0
        %v1085 = vsel %vm1047, %v1030, 0
        %v1088 = vsel %vm1047, %v1031, 0
        %v1091 = vsel %vm1047, %v1032, 0
        %v1094 = vsel %vm1047, %v1033, 0
        %1096 = vmatpush.msra.mxu0 0.0
        %1097 = vmatpush.msra.mxu0 0.0
        %1098 = vmatpush.msra.mxu0 0.0
        %1099 = vmatpush.msra.mxu0 0.0
        %1100 = vmatpush.msra.mxu0 0.0
        %1101 = vmatpush.msra.mxu0 0.0
        %1102 = vmatpush.msra.mxu0 0.0
        %1103 = vmatpush.msra.mxu0 %v1042
        %1104 = vmatpush.msra.mxu0 %v1041
        %1105 = vmatpush.msra.mxu0 %v1040
        %1106 = vmatpush.msra.mxu0 %v1039
        %1107 = vmatpush.msra.mxu0 %v1038
        %1108 = vmatpush.msra.mxu0 %v1037
        %1109 = vmatpush.msra.mxu0 %v1036
        %1110 = vmatpush.msra.mxu0 %v1035
        %1111 = vmatpush.msra.mxu0 %v1034
        %1112 = vmatmul.f32.gmra.mxu0 %v1049
        %v1113 = vpop.f32.mrf.mxu0
        %v1114 = vadd.f32 %v1045, %v1113
        %1115 = vmatmul.f32.gmra.mxu0 %v1052
        %v1116 = vpop.f32.mrf.mxu0
        %v1117 = vadd.f32 %v1045, %v1116
        %1118 = vmatmul.f32.gmra.mxu0 %v1055
        %v1119 = vpop.f32.mrf.mxu0
        %v1120 = vadd.f32 %v1045, %v1119
        %1121 = vmatmul.f32.gmra.mxu0 %v1058
        %v1122 = vpop.f32.mrf.mxu0
        %v1123 = vadd.f32 %v1045, %v1122
        %1124 = vmatmul.f32.gmra.mxu0 %v1061
        %v1125 = vpop.f32.mrf.mxu0
        %v1126 = vadd.f32 %v1045, %v1125
        %1127 = vmatmul.f32.gmra.mxu0 %v1064
        %v1128 = vpop.f32.mrf.mxu0
        %v1129 = vadd.f32 %v1045, %v1128
        %1130 = vmatmul.f32.gmra.mxu0 %v1067
        %v1131 = vpop.f32.mrf.mxu0
        %v1132 = vadd.f32 %v1045, %v1131
        %1133 = vmatmul.f32.gmra.mxu0 %v1070
        %v1134 = vpop.f32.mrf.mxu0
        %v1135 = vadd.f32 %v1045, %v1134
        %1136 = vmatmul.f32.gmra.mxu0 %v1073
        %v1137 = vpop.f32.mrf.mxu0
        %v1138 = vadd.f32 %v1045, %v1137
        %1139 = vmatmul.f32.gmra.mxu0 %v1076
        %v1140 = vpop.f32.mrf.mxu0
        %v1141 = vadd.f32 %v1045, %v1140
        %1142 = vmatmul.f32.gmra.mxu0 %v1079
        %v1143 = vpop.f32.mrf.mxu0
        %v1144 = vadd.f32 %v1045, %v1143
        %1145 = vmatmul.f32.gmra.mxu0 %v1082
        %v1146 = vpop.f32.mrf.mxu0
        %v1147 = vadd.f32 %v1045, %v1146
        %1148 = vmatmul.f32.gmra.mxu0 %v1085
        %v1149 = vpop.f32.mrf.mxu0
        %v1150 = vadd.f32 %v1045, %v1149
        %1151 = vmatmul.f32.gmra.mxu0 %v1088
        %v1152 = vpop.f32.mrf.mxu0
        %v1153 = vadd.f32 %v1045, %v1152
        %1154 = vmatmul.f32.gmra.mxu0 %v1091
        %v1155 = vpop.f32.mrf.mxu0
        %v1156 = vadd.f32 %v1045, %v1155
        %1157 = vmatmul.f32.gmra.mxu0 %v1094
        %v1158 = vpop.f32.mrf.mxu0
        %v1159 = vadd.f32 %v1045, %v1158
        %1160 = vdwg.mxu0
        %v1161 = vmax.f32 %v1114, 0.0
        %v1162 = vmax.f32 %v1117, 0.0
        %v1163 = vmax.f32 %v1120, 0.0
        %v1164 = vmax.f32 %v1123, 0.0
        %v1165 = vmax.f32 %v1126, 0.0
        %v1166 = vmax.f32 %v1129, 0.0
        %v1167 = vmax.f32 %v1132, 0.0
        %v1168 = vmax.f32 %v1135, 0.0
        %v1169 = vmax.f32 %v1138, 0.0
        %v1170 = vmax.f32 %v1141, 0.0
        %v1171 = vmax.f32 %v1144, 0.0
        %v1172 = vmax.f32 %v1147, 0.0
        %v1173 = vmax.f32 %v1150, 0.0
        %v1174 = vmax.f32 %v1153, 0.0
        %v1175 = vmax.f32 %v1156, 0.0
        %v1176 = vmax.f32 %v1159, 0.0
        %1177 = vst [vmem:[%s218] sm:$0xff] %v1161
        %1178 = vst [vmem:[%s218 + $0x8] sm:$0xff] %v1162
        %1179 = vst [vmem:[%s218 + $0x10] sm:$0xff] %v1163
        %1180 = vst [vmem:[%s218 + $0x18] sm:$0xff] %v1164
        %1181 = vst [vmem:[%s218 + $0x20] sm:$0xff] %v1165
        %1182 = vst [vmem:[%s218 + $0x28] sm:$0xff] %v1166
        %1183 = vst [vmem:[%s218 + $0x30] sm:$0xff] %v1167
        %1184 = vst [vmem:[%s218 + $0x38] sm:$0xff] %v1168
        %1185 = vst [vmem:[%s218 + $0x40] sm:$0xff] %v1169
        %1186 = vst [vmem:[%s218 + $0x48] sm:$0xff] %v1170
        %1187 = vst [vmem:[%s218 + $0x50] sm:$0xff] %v1171
        %1188 = vst [vmem:[%s218 + $0x58] sm:$0xff] %v1172
        %1189 = vst [vmem:[%s218 + $0x60] sm:$0xff] %v1173
        %1190 = vst [vmem:[%s218 + $0x68] sm:$0xff] %v1174
        %1191 = vst [vmem:[%s218 + $0x70] sm:$0xff] %v1175
        %1192 = vst [vmem:[%s218 + $0x78] sm:$0xff] %v1176
        %v1193 = vld [vmem:[%s224] sm:$0x1]
        %v1194 = vadd.f32 %v1161, %v1162
        %v1195 = vadd.f32 %v1194, %v1163
        %v1196 = vadd.f32 %v1195, %v1164
        %v1197 = vadd.f32 %v1196, %v1165
        %v1198 = vadd.f32 %v1197, %v1166
        %v1199 = vadd.f32 %v1198, %v1167
        %v1200 = vadd.f32 %v1199, %v1168
        %v1201 = vadd.f32 %v1200, %v1169
        %v1202 = vadd.f32 %v1201, %v1170
        %v1203 = vadd.f32 %v1202, %v1171
        %v1204 = vadd.f32 %v1203, %v1172
        %v1205 = vadd.f32 %v1204, %v1173
        %v1206 = vadd.f32 %v1205, %v1174
        %v1207 = vadd.f32 %v1206, %v1175
        %v1208 = vadd.f32 %v1207, %v1176
        %v1209 = vrot.slane %v1208, 4
        %v1210 = vadd.f32 %v1208, %v1209
        %v1211 = vrot.slane %v1210, 2
        %v1212 = vadd.f32 %v1210, %v1211
        %v1213 = vrot.slane %v1212, 1
        %v1214 = vadd.f32 %v1212, %v1213
        %v1215 = vadd.f32 %v1193, %v1214
        %1216 = vst [vmem:[%s224] sm:$0x1] %v1215
        %p1217 = scmp.eq.s32.totalorder %s27, 1
        // Predicated region
        $region37: #{tpu_custom_call.1} parent=31 // pred_check
          %p1218 = pneg %p1217
        $region38: #{tpu_custom_call.1} parent=31 // pred_check_branch
          %1220 = sbr.rel (%p1218) target = $region40
        $region39: #{tpu_custom_call.1} parent=31 // pred_region
          %v1221 = vld [vmem:[%s224] sm:$0x1]
          %v1222 = vmul.f32 %v1221, 0.00390625
          %1223 = vst [vmem:[%s224] sm:$0x1] %v1222
        $region40: #{tpu_custom_call.1} parent=31 // pred_fallthru
          _
        %s1224 = sand.u32 %s114, 1
        %s1225 = scalar_lea.sflag [#allocation3], %s1224
        %s1226 = sand.u32 %s114, 1
        %s1227 = smul.addr %s1226, 128
        %s1228 = scalar_lea.vmem [#allocation2], %s1227
        %s1229 = sand.u32 %s140, 1
        %s1230 = scalar_lea.sflag [#allocation5], %s1229
        %s1231 = sand.u32 %s140, 1
        %s1232 = scalar_lea.vmem [#allocation4], %s1231
        // Predicated region
        $region41: #{tpu_custom_call.1} parent=31 // pred_check
          %p1233 = pneg %p124
        $region42: #{tpu_custom_call.1} parent=31 // pred_check_branch
          %1235 = sbr.rel (%p1233) target = $region44
        $region43: #{tpu_custom_call.1} parent=31 // pred_region
          %s1236 = smul.u32 16, %s27
          %1238 = vsyncadd %s1225, 0
          %s1239 = smul.addr %s26, 32
          %s1240 = sadd.s32 %s1236, %s1239
          %s1241 = smul.addr %s1240, 8
          %s1242 = scalar_lea.hbm %s3, %s1241
          %s1243 = sshll.u32 %s1228, 4
          %s1244 = int_to_ptr.vmem [resolvable:$true] %s1243
          %s1245 = sshll.u32 %s1242, 4
          %s1246 = int_to_ptr.hbm [resolvable:$true] %s1245
          %1251 = dma.vmem_to_hbm [thread:$0]  %s1244, 2048, %s1246, %s1225, 128, 128, 8
        $region44: #{tpu_custom_call.1} parent=31 // pred_fallthru
          _
        // Predicated region
        $region45: #{tpu_custom_call.1} parent=31 // pred_check
          %p1252 = pneg %p150
        $region46: #{tpu_custom_call.1} parent=31 // pred_check_branch
          %1254 = sbr.rel (%p1252) target = $region48
        $region47: #{tpu_custom_call.1} parent=31 // pred_region
          %1256 = vsyncadd %s1230, 0
          %s1257 = scalar_lea.hbm %s4, %s26
          %s1259 = sshll.u32 %s1232, 4
          %s1260 = int_to_ptr.vmem [resolvable:$true] %s1259
          %s1261 = sshll.u32 %s1257, 4
          %s1262 = int_to_ptr.hbm [resolvable:$true] %s1261
          %1264 = dma.vmem_to_hbm [thread:$0]  %s1260, 16, %s1262, %s1230
        $region48: #{tpu_custom_call.1} parent=31 // pred_fallthru
          _
      $region32: #{tpu_custom_call.1} parent=5 // pred_fallthru
        _
      %p1265 = scmp.le.s32.totalorder 2, %s17
      // Predicated region
      $region49: #{tpu_custom_call.1} parent=5 // pred_check
        %p1266 = pneg %p1265
      $region50: #{tpu_custom_call.1} parent=5 // pred_check_branch
        %1268 = sbr.rel (%p1266) target = $region52
      $region51: #{tpu_custom_call.1} parent=5 // pred_region
        %s1269 = ssub.s32 %s17, 2
        // Predicated region
        $region53: #{tpu_custom_call.1} parent=51 // pred_check
          %p1270 = pneg %p130
        $region54: #{tpu_custom_call.1} parent=51 // pred_check_branch
          %1272 = sbr.rel (%p1270) target = $region56
        $region55: #{tpu_custom_call.1} parent=51 // pred_region
          %s1273 = sand.u32 %s115, 1
          %s1274 = scalar_lea.sflag [#allocation3], %s1273
          %s1275 = sand.u32 %s115, 1
          %s1276 = smul.addr %s1275, 128
          %s1277 = scalar_lea.vmem [#allocation2], %s1276
          %1279 = dma.done %s1274, 2048
        $region56: #{tpu_custom_call.1} parent=51 // pred_fallthru
          _
        // Predicated region
        $region57: #{tpu_custom_call.1} parent=51 // pred_check
          %p1280 = pneg %p156
        $region58: #{tpu_custom_call.1} parent=51 // pred_check_branch
          %1282 = sbr.rel (%p1280) target = $region60
        $region59: #{tpu_custom_call.1} parent=51 // pred_region
          %s1283 = sand.u32 %s141, 1
          %s1284 = scalar_lea.sflag [#allocation5], %s1283
          %s1285 = sand.u32 %s141, 1
          %s1286 = scalar_lea.vmem [#allocation4], %s1285
          %1288 = dma.done %s1284, 16
        $region60: #{tpu_custom_call.1} parent=51 // pred_fallthru
          _
      $region52: #{tpu_custom_call.1} parent=5 // pred_fallthru
        _
    $region6: #{tpu_custom_call.1} parent=1 // loop_footer
      %s21 = sadd.s32 1, %s17
    $region7: #{tpu_custom_call.1} parent=1 // loop_footer_branch
      %16 = sbr.rel target = $region3
    $region8: #{tpu_custom_call.1} parent=1 // loop_exit
      _
    %1289 = vsyncpa [#allocation3], 1
    %s1290 = scalar_lea.sflag [#allocation3], 1
    %1291 = vsyncpa %s1290, 1
    %1292 = vsyncpa [#allocation5], 1
    %s1293 = scalar_lea.sflag [#allocation5], 1
    %1294 = vsyncpa %s1293, 1

</llo_original>
